<compile_context>
chip_gen: v5e
topology: v5e:2x2
jax: 0.10.0
libtpu: 0.0.40
codegen_flags: <defaults>
</compile_context>

<pallas_src>
import functools

import jax
import jax.numpy as jnp
from jax import lax
from jax.experimental import pallas as pl
from jax.experimental.pallas import tpu as pltpu


# ---------------------------------------------------------------------------
# helpers: padding / tile selection (static, Python ints)
# ---------------------------------------------------------------------------
def _round_up(x: int, m: int) -> int:
    return (x + m - 1) // m * m


def _row_tiling(n: int) -> tuple[int, int]:
    """(row_tile, padded_rows): tile divides padded size, 8/128 aligned."""
    if n <= 128:
        t = _round_up(max(n, 1), 8)
        return t, t
    n_pad = _round_up(n, 128)
    tile = 256 if n_pad % 256 == 0 else 128
    return tile, n_pad


def _feat_tiling(f: int) -> tuple[int, int]:
    """(feature_tile, padded_features): lane aligned (multiple of 128)."""
    f_pad = _round_up(max(f, 1), 128)
    if f_pad <= 512:
        return f_pad, f_pad
    for t in (512, 384, 256, 128):
        if f_pad % t == 0:
            return t, f_pad
    return 128, f_pad  # unreachable: f_pad is a multiple of 128


def _pad2d(x, rows: int, cols: int):
    r, c = x.shape
    if r == rows and c == cols:
        return x
    return jnp.pad(x, ((0, rows - r), (0, cols - c)))


# ---------------------------------------------------------------------------
# Fused kernel: pairwise sqdist tile (MXU) + multi-kernel RBF exp-sum (EUP/VPU)
#   grid = (row tiles i, col tiles j, feature chunks k); k innermost (reduction)
# ---------------------------------------------------------------------------
def _fused_rbf_kernel(nbw_ref, coef_ref, x_ref, y_ref, xn_ref, yn_ref, o_ref, acc_ref,
                      *, zero_diag: bool, needs_mask: bool, num_kernel: int,
                      mul_is_2: bool, n_rows: int, n_cols: int, tm: int, tn: int):
    i = pl.program_id(0)
    j = pl.program_id(1)
    k = pl.program_id(2)

    # Zero the resident scalar output once, at the very first grid step.
    @pl.when((i == 0) & (j == 0) & (k == 0))
    def _():
        o_ref[...] = jnp.zeros_like(o_ref)

    # Zero the (tm, tn) dot-product accumulator at the start of each feature pass.
    @pl.when(k == 0)
    def _():
        acc_ref[...] = jnp.zeros_like(acc_ref)

    # x @ y^T for this feature chunk (MXU, f32 accumulation, no explicit transpose).
    acc_ref[...] += lax.dot_general(
        x_ref[...], y_ref[...],
        dimension_numbers=(((1,), (1,)), ((), ())),
        preferred_element_type=jnp.float32)

    # Epilogue on the last feature chunk: distances -> multi-kernel RBF -> scalar.
    @pl.when(k == pl.num_programs(2) - 1)
    def _():
        d = xn_ref[...] + yn_ref[...] - 2.0 * acc_ref[...]            # (tm, tn)
        d = jnp.maximum(d, 0.0)                                       # cdist^2 >= 0

        if zero_diag or needs_mask:
            ri = i * tm + lax.broadcasted_iota(jnp.int32, (tm, tn), 0)
            cj = j * tn + lax.broadcasted_iota(jnp.int32, (tm, tn), 1)
        if zero_diag:                                                 # L2 - diag(diagonal(L2))
            d = jnp.where(ri == cj, 0.0, d)

        if mul_is_2:
            # kernel_mul == 2: one exp, the rest via repeated squaring on the VPU:
            #   exp(-d / bw_{k-1}) = exp(-d / bw_k) ** 2
            e = jnp.exp(d * nbw_ref[num_kernel - 1])                  # largest bandwidth
            kv = coef_ref[num_kernel - 1] * e
            for kk in range(num_kernel - 2, -1, -1):
                e = e * e
                kv = kv + coef_ref[kk] * e
        else:
            kv = coef_ref[0] * jnp.exp(d * nbw_ref[0])
            for kk in range(1, num_kernel):
                kv = kv + coef_ref[kk] * jnp.exp(d * nbw_ref[kk])

        if needs_mask:                                                # drop zero-padded rows/cols
            kv = jnp.where((ri < n_rows) & (cj < n_cols), kv, 0.0)

        o_ref[...] += jnp.sum(kv, keepdims=True)                      # single cross-lane reduce


def _fused_rbf_sum(x, y, x_norm, y_norm, neg_inv_bw, coefs, *, zero_diag: bool,
                   n_rows: int, n_cols: int, tm: int, tn: int, tk: int,
                   num_kernel: int, mul_is_2: bool):
    np_x, fp = x.shape
    np_y = y.shape[0]
    gi, gj, gk = np_x // tm, np_y // tn, fp // tk
    needs_mask = (np_x != n_rows) or (np_y != n_cols)

    kernel = functools.partial(
        _fused_rbf_kernel, zero_diag=zero_diag, needs_mask=needs_mask,
        num_kernel=num_kernel, mul_is_2=mul_is_2,
        n_rows=n_rows, n_cols=n_cols, tm=tm, tn=tn)

    out = pl.pallas_call(
        kernel,
        out_shape=jax.ShapeDtypeStruct((1, 1), jnp.float32),
        grid=(gi, gj, gk),
        in_specs=[
            pl.BlockSpec(memory_space=pltpu.MemorySpace.SMEM),    # -1/bandwidth_k  (K,)
            pl.BlockSpec(memory_space=pltpu.MemorySpace.SMEM),    # coefficients    (K,)
            pl.BlockSpec((tm, tk), lambda i, j, k: (i, k)),       # x row block
            pl.BlockSpec((tn, tk), lambda i, j, k: (j, k)),       # y row block
            pl.BlockSpec((tm, 1), lambda i, j, k: (i, 0)),        # ||x_i||^2 column
            pl.BlockSpec((1, tn), lambda i, j, k: (0, j)),        # ||y_j||^2 row
        ],
        # Resident scalar accumulator: same output block for every grid step, so
        # every grid axis must be "arbitrary" (sequential accumulate semantics).
        out_specs=pl.BlockSpec((1, 1), lambda i, j, k: (0, 0)),
        scratch_shapes=[pltpu.VMEM((tm, tn), jnp.float32)],
        compiler_params=pltpu.CompilerParams(
            dimension_semantics=("arbitrary", "arbitrary", "arbitrary")),
    )(neg_inv_bw, coefs, x, y, x_norm, y_norm)
    return out[0, 0]


# ---------------------------------------------------------------------------
# Forward pass (jitted glue around the three fused pallas_calls)
# ---------------------------------------------------------------------------
@functools.partial(jax.jit,
                   static_argnames=("kernel_mul", "num_kernel", "fix_sigma", "coefficient"))
def _mkmmd_forward(source, target, *, kernel_mul, num_kernel, fix_sigma, coefficient):
    source = source.astype(jnp.float32)
    target = target.astype(jnp.float32)
    ns, f = source.shape
    nt = target.shape[0]

    # --- tiling / zero padding (static) -----------------------------------
    s_tile, ns_pad = _row_tiling(ns)
    t_tile, nt_pad = _row_tiling(nt)
    f_tile, f_pad = _feat_tiling(f)

    src = _pad2d(source, ns_pad, f_pad)
    tgt = _pad2d(target, nt_pad, f_pad)

    # Row norms computed once (O(N*F)) and streamed per-tile into the kernel.
    s_norm_col = jnp.sum(src * src, axis=1, keepdims=True)            # (ns_pad, 1)
    t_norm_col = jnp.sum(tgt * tgt, axis=1, keepdims=True)            # (nt_pad, 1)
    s_norm_row = s_norm_col.reshape(1, ns_pad)
    t_norm_row = t_norm_col.reshape(1, nt_pad)

    # --- bandwidth selection (scalar glue) ---------------------------------
    if fix_sigma is not None:
        bandwidth = jnp.float32(fix_sigma)
    else:
        # sum_{i != j} ||t_i - t_j||^2 == 2*N*sum_i ||t_i||^2 - 2*||sum_i t_i||^2
        # (closed form; avoids a whole extra N^2 pass just for the bandwidth).
        s2 = jnp.sum(jnp.square(target))
        m2 = jnp.sum(jnp.square(jnp.sum(target, axis=0)))
        bandwidth = (2.0 * nt * s2 - 2.0 * m2) / jnp.float32(nt * nt - nt)
    base_bw = bandwidth / (kernel_mul ** (num_kernel // 2))
    bw_list = jnp.stack([base_bw * (kernel_mul ** i) for i in range(num_kernel)])
    neg_inv_bw = (-1.0 / bw_list).astype(jnp.float32)                 # multiply, not divide

    # --- kernel coefficients ------------------------------------------------
    if coefficient == 'ones':
        coefs = jnp.ones((num_kernel,), jnp.float32)
    else:  # 'auto' -> Hamming window, normalized so coefficients sum to num_kernel
        if num_kernel == 1:
            w = jnp.ones((1,), jnp.float32)
        else:
            n = jnp.arange(num_kernel, dtype=jnp.float32)
            w = 0.54 - 0.46 * jnp.cos(2.0 * jnp.pi * n / (num_kernel - 1))
        coefs = (w / jnp.sum(w) * num_kernel).astype(jnp.float32)

    mul_is_2 = float(kernel_mul) == 2.0
    common = dict(num_kernel=num_kernel, mul_is_2=mul_is_2, tk=f_tile)

    # Three fused (sqdist + multi-kernel RBF sum) launches, no N^2 HBM traffic.
    xx = _fused_rbf_sum(src, src, s_norm_col, s_norm_row, neg_inv_bw, coefs,
                        zero_diag=True, n_rows=ns, n_cols=ns,
                        tm=s_tile, tn=s_tile, **common)
    yy = _fused_rbf_sum(tgt, tgt, t_norm_col, t_norm_row, neg_inv_bw, coefs,
                        zero_diag=True, n_rows=nt, n_cols=nt,
                        tm=t_tile, tn=t_tile, **common)
    xy = _fused_rbf_sum(src, tgt, s_norm_col, t_norm_row, neg_inv_bw, coefs,
                        zero_diag=False, n_rows=ns, n_cols=nt,
                        tm=s_tile, tn=t_tile, **common)

    xx = xx * (1.0 / (ns * max(ns - 1, 1.0)))
    yy = yy * (1.0 / (nt * max(nt - 1, 1.0)))
    xy = xy * (2.0 / (ns * nt))
    return xx + yy - xy


# ---------------------------------------------------------------------------
# MkMMD module (forward-pass semantics matching the PyTorch reference)
# ---------------------------------------------------------------------------
class MkMMD:
    def __init__(self, kernel_type: str = 'rbf', kernel_mul: float = 2.0,
                 num_kernel: int = 5, fix_sigma: float | None = None,
                 coefficient: str = 'ones'):
        assert coefficient in {'auto', 'ones'}
        self.kernel_type = kernel_type
        self.kernel_mul = float(kernel_mul)
        self.num_kernel = int(num_kernel)
        self.fix_sigma = fix_sigma
        self.coefficient = coefficient

    @staticmethod
    def flatten_to_2d(x):
        if x.ndim == 2:
            return x
        elif x.ndim == 3:
            b, d, l = x.shape
            return x.reshape(b, d * l)        # 'b d l -> b (d l)'
        else:
            raise ValueError(f'x should be 2d or 3d, but got {x.ndim}')

    def __call__(self, source, target):
        return self.forward(source, target)

    def forward(self, source, target):
        """source/target: shape (batch, D, sequence). Last 2 dims flattened."""
        source = self.flatten_to_2d(source)
        target = self.flatten_to_2d(target)
        return _mkmmd_forward(source, target,
                              kernel_mul=self.kernel_mul,
                              num_kernel=self.num_kernel,
                              fix_sigma=self.fix_sigma,
                              coefficient=self.coefficient)


if __name__ == "__main__":
    key = jax.random.PRNGKey(0)
    k1, k2, k3, k4 = jax.random.split(key, 4)

    # Small case (batch, D, sequence) -- single-tile path.
    source = jax.random.normal(k1, (8, 4, 16), dtype=jnp.float32)
    target = jax.random.normal(k2, (8, 4, 16), dtype=jnp.float32)
    mmd = MkMMD(kernel_type='rbf', kernel_mul=2.0, num_kernel=5,
                fix_sigma=None, coefficient='ones')
    loss = mmd(source, target)
    jax.block_until_ready(loss)

    # Larger, non-aligned case -- exercises the multi-tile grid, feature chunking,
    # padding masks and the 'auto' (Hamming) coefficient path.
    source2 = jax.random.normal(k3, (320, 4, 160), dtype=jnp.float32)
    target2 = jax.random.normal(k4, (288, 4, 160), dtype=jnp.float32)
    mmd2 = MkMMD(kernel_type='rbf', kernel_mul=2.0, num_kernel=5,
                 fix_sigma=None, coefficient='auto')
    loss2 = mmd2(source2, target2)
    jax.block_until_ready(loss2)

    print("KERNEL_OK")
</pallas_src>

<mosaic_0001>
module attributes {stable_mosaic.version = 11 : i64} {
  func.func @_fused_rbf_kernel(%arg0: i32, %arg1: i32, %arg2: i32, %arg3: memref<5xf32, #tpu.memory_space<smem>>, %arg4: memref<5xf32, #tpu.memory_space<smem>>, %arg5: memref<8x128xf32, #tpu.memory_space<vmem>>, %arg6: memref<8x128xf32, #tpu.memory_space<vmem>>, %arg7: memref<8x1xf32, #tpu.memory_space<vmem>>, %arg8: memref<1x8xf32, #tpu.memory_space<vmem>>, %arg9: memref<1x1xf32, #tpu.memory_space<vmem>>, %arg10: memref<8x8xf32, #tpu.memory_space<vmem>>) attributes {dimension_semantics = [#tpu.dimension_semantics<arbitrary>, #tpu.dimension_semantics<arbitrary>, #tpu.dimension_semantics<arbitrary>], iteration_bounds = array<i64: 1, 1, 1>, scalar_prefetch = 0 : i64, scratch_operands = 1 : i64, tpu.core_type = #tpu.core_type<tc>, window_params = [{transform_indices = @transform_0, window_bounds = array<i64: 5>}, {transform_indices = @transform_1, window_bounds = array<i64: 5>}, {transform_indices = @transform_2, window_bounds = array<i64: 8, 128>}, {transform_indices = @transform_3, window_bounds = array<i64: 8, 128>}, {transform_indices = @transform_4, window_bounds = array<i64: 8, 1>}, {transform_indices = @transform_5, window_bounds = array<i64: 1, 8>}, {pipeline_mode = #tpu.pipeline_mode<synchronous>, transform_indices = @transform_6, window_bounds = array<i64: 1, 1>}]} {
    %c0_i32 = arith.constant 0 : i32
    %0 = arith.cmpi eq, %arg0, %c0_i32 : i32
    %c0_i32_0 = arith.constant 0 : i32
    %1 = arith.cmpi eq, %arg1, %c0_i32_0 : i32
    %2 = arith.andi %0, %1 : i1
    %c0_i32_1 = arith.constant 0 : i32
    %3 = arith.cmpi eq, %arg2, %c0_i32_1 : i32
    %4 = arith.andi %2, %3 : i1
    %5 = arith.extui %4 : i1 to i32
    %c0_i32_2 = arith.constant 0 : i32
    %6 = arith.cmpi ne, %5, %c0_i32_2 : i32
    scf.if %6 {
      %cst_14 = arith.constant 0.000000e+00 : f32
      %19 = vector.broadcast %cst_14 : f32 to vector<1x1xf32>
      %c0_15 = arith.constant 0 : index
      %c0_16 = arith.constant 0 : index
      %20 = vector.load %arg9[%c0_15, %c0_16] : memref<1x1xf32, #tpu.memory_space<vmem>>, vector<1x1xf32>
      tpu.vector_store %arg9[%c0_15, %c0_16], %19 {strides = array<i32>} : memref<1x1xf32, #tpu.memory_space<vmem>>, vector<1x1xf32>,
    } else {
    }
    %c0_i32_3 = arith.constant 0 : i32
    %7 = arith.cmpi eq, %arg2, %c0_i32_3 : i32
    %8 = arith.extui %7 : i1 to i32
    %c0_i32_4 = arith.constant 0 : i32
    %9 = arith.cmpi ne, %8, %c0_i32_4 : i32
    scf.if %9 {
      %cst_14 = arith.constant 0.000000e+00 : f32
      %19 = vector.broadcast %cst_14 : f32 to vector<8x8xf32>
      %c0_15 = arith.constant 0 : index
      %c0_16 = arith.constant 0 : index
      %20 = vector.load %arg10[%c0_15, %c0_16] : memref<8x8xf32, #tpu.memory_space<vmem>>, vector<8x8xf32>
      tpu.vector_store %arg10[%c0_15, %c0_16], %19 {strides = array<i32>} : memref<8x8xf32, #tpu.memory_space<vmem>>, vector<8x8xf32>,
    } else {
    }
    %c0 = arith.constant 0 : index
    %c0_5 = arith.constant 0 : index
    %10 = vector.load %arg10[%c0, %c0_5] : memref<8x8xf32, #tpu.memory_space<vmem>>, vector<8x8xf32>
    %c0_6 = arith.constant 0 : index
    %c0_7 = arith.constant 0 : index
    %11 = vector.load %arg5[%c0_6, %c0_7] : memref<8x128xf32, #tpu.memory_space<vmem>>, vector<8x128xf32>
    %c0_8 = arith.constant 0 : index
    %c0_9 = arith.constant 0 : index
    %12 = vector.load %arg6[%c0_8, %c0_9] : memref<8x128xf32, #tpu.memory_space<vmem>>, vector<8x128xf32>
    %cst = arith.constant dense<0.000000e+00> : vector<8x8xf32>
    %13 = tpu.matmul %11, %12, %cst {dimension_numbers = #tpu.dot_dimension_numbers<[1], [1], [0], [0], [0, 0, 1, 0], [], []>} : vector<8x128xf32>, vector<8x128xf32>, vector<8x8xf32> -> vector<8x8xf32>
    %14 = arith.addf %10, %13 : vector<8x8xf32>
    %c0_10 = arith.constant 0 : index
    %c0_11 = arith.constant 0 : index
    %15 = vector.load %arg10[%c0_10, %c0_11] : memref<8x8xf32, #tpu.memory_space<vmem>>, vector<8x8xf32>
    tpu.vector_store %arg10[%c0_10, %c0_11], %14 {strides = array<i32>} : memref<8x8xf32, #tpu.memory_space<vmem>>, vector<8x8xf32>,
    %c0_i32_12 = arith.constant 0 : i32
    %16 = arith.cmpi eq, %arg2, %c0_i32_12 : i32
    %17 = arith.extui %16 : i1 to i32
    %c0_i32_13 = arith.constant 0 : i32
    %18 = arith.cmpi ne, %17, %c0_i32_13 : i32
    scf.if %18 {
      %c0_14 = arith.constant 0 : index
      %c0_15 = arith.constant 0 : index
      %19 = vector.load %arg7[%c0_14, %c0_15] : memref<8x1xf32, #tpu.memory_space<vmem>>, vector<8x1xf32>
      %c0_16 = arith.constant 0 : index
      %c0_17 = arith.constant 0 : index
      %20 = vector.load %arg8[%c0_16, %c0_17] : memref<1x8xf32, #tpu.memory_space<vmem>>, vector<1x8xf32>
      %21 = vector.broadcast %19 : vector<8x1xf32> to vector<8x8xf32>
      %22 = vector.broadcast %20 : vector<1x8xf32> to vector<8x8xf32>
      %23 = arith.addf %21, %22 : vector<8x8xf32>
      %c0_18 = arith.constant 0 : index
      %c0_19 = arith.constant 0 : index
      %24 = vector.load %arg10[%c0_18, %c0_19] : memref<8x8xf32, #tpu.memory_space<vmem>>, vector<8x8xf32>
      %cst_20 = arith.constant 2.000000e+00 : f32
      %25 = vector.broadcast %cst_20 : f32 to vector<8x8xf32>
      %26 = arith.mulf %25, %24 : vector<8x8xf32>
      %27 = arith.subf %23, %26 : vector<8x8xf32>
      %cst_21 = arith.constant 0.000000e+00 : f32
      %28 = vector.broadcast %cst_21 : f32 to vector<8x8xf32>
      %29 = arith.maximumf %27, %28 : vector<8x8xf32>
      %c8_i32 = arith.constant 8 : i32
      %30 = arith.muli %arg0, %c8_i32 : i32
      %31 = tpu.iota {dimensions = array<i32: 0>} : vector<8x8xi32>
      %32 = vector.broadcast %30 : i32 to vector<8x8xi32>
      %33 = arith.addi %32, %31 : vector<8x8xi32>
      %c8_i32_22 = arith.constant 8 : i32
      %34 = arith.muli %arg1, %c8_i32_22 : i32
      %35 = tpu.iota {dimensions = array<i32: 1>} : vector<8x8xi32>
      %36 = vector.broadcast %34 : i32 to vector<8x8xi32>
      %37 = arith.addi %36, %35 : vector<8x8xi32>
      %38 = arith.cmpi eq, %33, %37 : vector<8x8xi32>
      %cst_23 = arith.constant 0.000000e+00 : f32
      %39 = vector.broadcast %cst_23 : f32 to vector<8x8xf32>
      %40 = arith.select %38, %39, %29 : vector<8x8xi1>, vector<8x8xf32>
      %c4 = arith.constant 4 : index
      %41 = memref.load %arg3[%c4] : memref<5xf32, #tpu.memory_space<smem>>
      %42 = vector.broadcast %41 : f32 to vector<8x8xf32>
      %43 = arith.mulf %40, %42 : vector<8x8xf32>
      %44 = math.exp %43 : vector<8x8xf32>
      %c4_24 = arith.constant 4 : index
      %45 = memref.load %arg4[%c4_24] : memref<5xf32, #tpu.memory_space<smem>>
      %46 = vector.broadcast %45 : f32 to vector<8x8xf32>
      %47 = arith.mulf %46, %44 : vector<8x8xf32>
      %48 = arith.mulf %44, %44 : vector<8x8xf32>
      %c3 = arith.constant 3 : index
      %49 = memref.load %arg4[%c3] : memref<5xf32, #tpu.memory_space<smem>>
      %50 = vector.broadcast %49 : f32 to vector<8x8xf32>
      %51 = arith.mulf %50, %48 : vector<8x8xf32>
      %52 = arith.addf %47, %51 : vector<8x8xf32>
      %53 = arith.mulf %48, %48 : vector<8x8xf32>
      %c2 = arith.constant 2 : index
      %54 = memref.load %arg4[%c2] : memref<5xf32, #tpu.memory_space<smem>>
      %55 = vector.broadcast %54 : f32 to vector<8x8xf32>
      %56 = arith.mulf %55, %53 : vector<8x8xf32>
      %57 = arith.addf %52, %56 : vector<8x8xf32>
      %58 = arith.mulf %53, %53 : vector<8x8xf32>
      %c1 = arith.constant 1 : index
      %59 = memref.load %arg4[%c1] : memref<5xf32, #tpu.memory_space<smem>>
      %60 = vector.broadcast %59 : f32 to vector<8x8xf32>
      %61 = arith.mulf %60, %58 : vector<8x8xf32>
      %62 = arith.addf %57, %61 : vector<8x8xf32>
      %63 = arith.mulf %58, %58 : vector<8x8xf32>
      %c0_25 = arith.constant 0 : index
      %64 = memref.load %arg4[%c0_25] : memref<5xf32, #tpu.memory_space<smem>>
      %65 = vector.broadcast %64 : f32 to vector<8x8xf32>
      %66 = arith.mulf %65, %63 : vector<8x8xf32>
      %67 = arith.addf %62, %66 : vector<8x8xf32>
      %c0_26 = arith.constant 0 : index
      %c0_27 = arith.constant 0 : index
      %68 = vector.load %arg9[%c0_26, %c0_27] : memref<1x1xf32, #tpu.memory_space<vmem>>, vector<1x1xf32>
      %69 = vector.shape_cast %67 : vector<8x8xf32> to vector<1x8x8xf32>
      %cst_28 = arith.constant dense<0.000000e+00> : vector<1xf32>
      %70 = vector.multi_reduction <add>, %69, %cst_28 [1, 2] : vector<1x8x8xf32> to vector<1xf32>
      %71 = vector.shape_cast %70 : vector<1xf32> to vector<1x1x1xf32>
      %72 = vector.extract %71[0, 0, 0] : f32 from vector<1x1x1xf32>
      %73 = vector.broadcast %72 : f32 to vector<1x1xf32>
      %74 = arith.addf %68, %73 : vector<1x1xf32>
      %c0_29 = arith.constant 0 : index
      %c0_30 = arith.constant 0 : index
      %75 = vector.load %arg9[%c0_29, %c0_30] : memref<1x1xf32, #tpu.memory_space<vmem>>, vector<1x1xf32>
      tpu.vector_store %arg9[%c0_29, %c0_30], %74 {strides = array<i32>} : memref<1x1xf32, #tpu.memory_space<vmem>>, vector<1x1xf32>,
    } else {
    }
    return
  }
  func.func @transform_0(%arg0: i32, %arg1: i32, %arg2: i32) -> i32 {
    %c0_i32 = arith.constant 0 : i32
    %c0_i32_0 = arith.constant 0 : i32
    return %c0_i32 : i32
  }
  func.func @transform_1(%arg0: i32, %arg1: i32, %arg2: i32) -> i32 {
    %c0_i32 = arith.constant 0 : i32
    %c0_i32_0 = arith.constant 0 : i32
    return %c0_i32 : i32
  }
  func.func @transform_2(%arg0: i32, %arg1: i32, %arg2: i32) -> (i32, i32) {
    %c0_i32 = arith.constant 0 : i32
    return %arg0, %arg2 : i32, i32
  }
  func.func @transform_3(%arg0: i32, %arg1: i32, %arg2: i32) -> (i32, i32) {
    %c0_i32 = arith.constant 0 : i32
    return %arg1, %arg2 : i32, i32
  }
  func.func @transform_4(%arg0: i32, %arg1: i32, %arg2: i32) -> (i32, i32) {
    %c0_i32 = arith.constant 0 : i32
    %c0_i32_0 = arith.constant 0 : i32
    return %arg0, %c0_i32 : i32, i32
  }
  func.func @transform_5(%arg0: i32, %arg1: i32, %arg2: i32) -> (i32, i32) {
    %c0_i32 = arith.constant 0 : i32
    %c0_i32_0 = arith.constant 0 : i32
    return %c0_i32, %arg1 : i32, i32
  }
  func.func @transform_6(%arg0: i32, %arg1: i32, %arg2: i32) -> (i32, i32) {
    %c0_i32 = arith.constant 0 : i32
    %c0_i32_0 = arith.constant 0 : i32
    %c0_i32_1 = arith.constant 0 : i32
    return %c0_i32, %c0_i32_0 : i32, i32
  }
}

module attributes {stable_mosaic.version = 11 : i64} {
  func.func @_fused_rbf_kernel(%arg0: i32, %arg1: i32, %arg2: i32, %arg3: memref<5xf32, #tpu.memory_space<smem>>, %arg4: memref<5xf32, #tpu.memory_space<smem>>, %arg5: memref<8x128xf32, #tpu.memory_space<vmem>>, %arg6: memref<8x128xf32, #tpu.memory_space<vmem>>, %arg7: memref<8x1xf32, #tpu.memory_space<vmem>>, %arg8: memref<1x8xf32, #tpu.memory_space<vmem>>, %arg9: memref<1x1xf32, #tpu.memory_space<vmem>>, %arg10: memref<8x8xf32, #tpu.memory_space<vmem>>) attributes {dimension_semantics = [#tpu.dimension_semantics<arbitrary>, #tpu.dimension_semantics<arbitrary>, #tpu.dimension_semantics<arbitrary>], iteration_bounds = array<i64: 1, 1, 1>, scalar_prefetch = 0 : i64, scratch_operands = 1 : i64, tpu.core_type = #tpu.core_type<tc>, window_params = [{transform_indices = @transform_0, window_bounds = array<i64: 5>}, {transform_indices = @transform_1, window_bounds = array<i64: 5>}, {transform_indices = @transform_2, window_bounds = array<i64: 8, 128>}, {transform_indices = @transform_3, window_bounds = array<i64: 8, 128>}, {transform_indices = @transform_4, window_bounds = array<i64: 8, 1>}, {transform_indices = @transform_5, window_bounds = array<i64: 1, 8>}, {pipeline_mode = #tpu.pipeline_mode<synchronous>, transform_indices = @transform_6, window_bounds = array<i64: 1, 1>}]} {
    %c0_i32 = arith.constant 0 : i32
    %0 = arith.cmpi eq, %arg0, %c0_i32 : i32
    %c0_i32_0 = arith.constant 0 : i32
    %1 = arith.cmpi eq, %arg1, %c0_i32_0 : i32
    %2 = arith.andi %0, %1 : i1
    %c0_i32_1 = arith.constant 0 : i32
    %3 = arith.cmpi eq, %arg2, %c0_i32_1 : i32
    %4 = arith.andi %2, %3 : i1
    %5 = arith.extui %4 : i1 to i32
    %c0_i32_2 = arith.constant 0 : i32
    %6 = arith.cmpi ne, %5, %c0_i32_2 : i32
    scf.if %6 {
      %cst_14 = arith.constant 0.000000e+00 : f32
      %19 = vector.broadcast %cst_14 : f32 to vector<1x1xf32>
      %c0_15 = arith.constant 0 : index
      %c0_16 = arith.constant 0 : index
      %20 = vector.load %arg9[%c0_15, %c0_16] : memref<1x1xf32, #tpu.memory_space<vmem>>, vector<1x1xf32>
      tpu.vector_store %arg9[%c0_15, %c0_16], %19 {strides = array<i32>} : memref<1x1xf32, #tpu.memory_space<vmem>>, vector<1x1xf32>,
    } else {
    }
    %c0_i32_3 = arith.constant 0 : i32
    %7 = arith.cmpi eq, %arg2, %c0_i32_3 : i32
    %8 = arith.extui %7 : i1 to i32
    %c0_i32_4 = arith.constant 0 : i32
    %9 = arith.cmpi ne, %8, %c0_i32_4 : i32
    scf.if %9 {
      %cst_14 = arith.constant 0.000000e+00 : f32
      %19 = vector.broadcast %cst_14 : f32 to vector<8x8xf32>
      %c0_15 = arith.constant 0 : index
      %c0_16 = arith.constant 0 : index
      %20 = vector.load %arg10[%c0_15, %c0_16] : memref<8x8xf32, #tpu.memory_space<vmem>>, vector<8x8xf32>
      tpu.vector_store %arg10[%c0_15, %c0_16], %19 {strides = array<i32>} : memref<8x8xf32, #tpu.memory_space<vmem>>, vector<8x8xf32>,
    } else {
    }
    %c0 = arith.constant 0 : index
    %c0_5 = arith.constant 0 : index
    %10 = vector.load %arg10[%c0, %c0_5] : memref<8x8xf32, #tpu.memory_space<vmem>>, vector<8x8xf32>
    %c0_6 = arith.constant 0 : index
    %c0_7 = arith.constant 0 : index
    %11 = vector.load %arg5[%c0_6, %c0_7] : memref<8x128xf32, #tpu.memory_space<vmem>>, vector<8x128xf32>
    %c0_8 = arith.constant 0 : index
    %c0_9 = arith.constant 0 : index
    %12 = vector.load %arg6[%c0_8, %c0_9] : memref<8x128xf32, #tpu.memory_space<vmem>>, vector<8x128xf32>
    %cst = arith.constant dense<0.000000e+00> : vector<8x8xf32>
    %13 = tpu.matmul %11, %12, %cst {dimension_numbers = #tpu.dot_dimension_numbers<[1], [1], [0], [0], [0, 0, 1, 0], [], []>} : vector<8x128xf32>, vector<8x128xf32>, vector<8x8xf32> -> vector<8x8xf32>
    %14 = arith.addf %10, %13 : vector<8x8xf32>
    %c0_10 = arith.constant 0 : index
    %c0_11 = arith.constant 0 : index
    %15 = vector.load %arg10[%c0_10, %c0_11] : memref<8x8xf32, #tpu.memory_space<vmem>>, vector<8x8xf32>
    tpu.vector_store %arg10[%c0_10, %c0_11], %14 {strides = array<i32>} : memref<8x8xf32, #tpu.memory_space<vmem>>, vector<8x8xf32>,
    %c0_i32_12 = arith.constant 0 : i32
    %16 = arith.cmpi eq, %arg2, %c0_i32_12 : i32
    %17 = arith.extui %16 : i1 to i32
    %c0_i32_13 = arith.constant 0 : i32
    %18 = arith.cmpi ne, %17, %c0_i32_13 : i32
    scf.if %18 {
      %c0_14 = arith.constant 0 : index
      %c0_15 = arith.constant 0 : index
      %19 = vector.load %arg7[%c0_14, %c0_15] : memref<8x1xf32, #tpu.memory_space<vmem>>, vector<8x1xf32>
      %c0_16 = arith.constant 0 : index
      %c0_17 = arith.constant 0 : index
      %20 = vector.load %arg8[%c0_16, %c0_17] : memref<1x8xf32, #tpu.memory_space<vmem>>, vector<1x8xf32>
      %21 = vector.broadcast %19 : vector<8x1xf32> to vector<8x8xf32>
      %22 = vector.broadcast %20 : vector<1x8xf32> to vector<8x8xf32>
      %23 = arith.addf %21, %22 : vector<8x8xf32>
      %c0_18 = arith.constant 0 : index
      %c0_19 = arith.constant 0 : index
      %24 = vector.load %arg10[%c0_18, %c0_19] : memref<8x8xf32, #tpu.memory_space<vmem>>, vector<8x8xf32>
      %cst_20 = arith.constant 2.000000e+00 : f32
      %25 = vector.broadcast %cst_20 : f32 to vector<8x8xf32>
      %26 = arith.mulf %25, %24 : vector<8x8xf32>
      %27 = arith.subf %23, %26 : vector<8x8xf32>
      %cst_21 = arith.constant 0.000000e+00 : f32
      %28 = vector.broadcast %cst_21 : f32 to vector<8x8xf32>
      %29 = arith.maximumf %27, %28 : vector<8x8xf32>
      %c4 = arith.constant 4 : index
      %30 = memref.load %arg3[%c4] : memref<5xf32, #tpu.memory_space<smem>>
      %31 = vector.broadcast %30 : f32 to vector<8x8xf32>
      %32 = arith.mulf %29, %31 : vector<8x8xf32>
      %33 = math.exp %32 : vector<8x8xf32>
      %c4_22 = arith.constant 4 : index
      %34 = memref.load %arg4[%c4_22] : memref<5xf32, #tpu.memory_space<smem>>
      %35 = vector.broadcast %34 : f32 to vector<8x8xf32>
      %36 = arith.mulf %35, %33 : vector<8x8xf32>
      %37 = arith.mulf %33, %33 : vector<8x8xf32>
      %c3 = arith.constant 3 : index
      %38 = memref.load %arg4[%c3] : memref<5xf32, #tpu.memory_space<smem>>
      %39 = vector.broadcast %38 : f32 to vector<8x8xf32>
      %40 = arith.mulf %39, %37 : vector<8x8xf32>
      %41 = arith.addf %36, %40 : vector<8x8xf32>
      %42 = arith.mulf %37, %37 : vector<8x8xf32>
      %c2 = arith.constant 2 : index
      %43 = memref.load %arg4[%c2] : memref<5xf32, #tpu.memory_space<smem>>
      %44 = vector.broadcast %43 : f32 to vector<8x8xf32>
      %45 = arith.mulf %44, %42 : vector<8x8xf32>
      %46 = arith.addf %41, %45 : vector<8x8xf32>
      %47 = arith.mulf %42, %42 : vector<8x8xf32>
      %c1 = arith.constant 1 : index
      %48 = memref.load %arg4[%c1] : memref<5xf32, #tpu.memory_space<smem>>
      %49 = vector.broadcast %48 : f32 to vector<8x8xf32>
      %50 = arith.mulf %49, %47 : vector<8x8xf32>
      %51 = arith.addf %46, %50 : vector<8x8xf32>
      %52 = arith.mulf %47, %47 : vector<8x8xf32>
      %c0_23 = arith.constant 0 : index
      %53 = memref.load %arg4[%c0_23] : memref<5xf32, #tpu.memory_space<smem>>
      %54 = vector.broadcast %53 : f32 to vector<8x8xf32>
      %55 = arith.mulf %54, %52 : vector<8x8xf32>
      %56 = arith.addf %51, %55 : vector<8x8xf32>
      %c0_24 = arith.constant 0 : index
      %c0_25 = arith.constant 0 : index
      %57 = vector.load %arg9[%c0_24, %c0_25] : memref<1x1xf32, #tpu.memory_space<vmem>>, vector<1x1xf32>
      %58 = vector.shape_cast %56 : vector<8x8xf32> to vector<1x8x8xf32>
      %cst_26 = arith.constant dense<0.000000e+00> : vector<1xf32>
      %59 = vector.multi_reduction <add>, %58, %cst_26 [1, 2] : vector<1x8x8xf32> to vector<1xf32>
      %60 = vector.shape_cast %59 : vector<1xf32> to vector<1x1x1xf32>
      %61 = vector.extract %60[0, 0, 0] : f32 from vector<1x1x1xf32>
      %62 = vector.broadcast %61 : f32 to vector<1x1xf32>
      %63 = arith.addf %57, %62 : vector<1x1xf32>
      %c0_27 = arith.constant 0 : index
      %c0_28 = arith.constant 0 : index
      %64 = vector.load %arg9[%c0_27, %c0_28] : memref<1x1xf32, #tpu.memory_space<vmem>>, vector<1x1xf32>
      tpu.vector_store %arg9[%c0_27, %c0_28], %63 {strides = array<i32>} : memref<1x1xf32, #tpu.memory_space<vmem>>, vector<1x1xf32>,
    } else {
    }
    return
  }
  func.func @transform_0(%arg0: i32, %arg1: i32, %arg2: i32) -> i32 {
    %c0_i32 = arith.constant 0 : i32
    %c0_i32_0 = arith.constant 0 : i32
    return %c0_i32 : i32
  }
  func.func @transform_1(%arg0: i32, %arg1: i32, %arg2: i32) -> i32 {
    %c0_i32 = arith.constant 0 : i32
    %c0_i32_0 = arith.constant 0 : i32
    return %c0_i32 : i32
  }
  func.func @transform_2(%arg0: i32, %arg1: i32, %arg2: i32) -> (i32, i32) {
    %c0_i32 = arith.constant 0 : i32
    return %arg0, %arg2 : i32, i32
  }
  func.func @transform_3(%arg0: i32, %arg1: i32, %arg2: i32) -> (i32, i32) {
    %c0_i32 = arith.constant 0 : i32
    return %arg1, %arg2 : i32, i32
  }
  func.func @transform_4(%arg0: i32, %arg1: i32, %arg2: i32) -> (i32, i32) {
    %c0_i32 = arith.constant 0 : i32
    %c0_i32_0 = arith.constant 0 : i32
    return %arg0, %c0_i32 : i32, i32
  }
  func.func @transform_5(%arg0: i32, %arg1: i32, %arg2: i32) -> (i32, i32) {
    %c0_i32 = arith.constant 0 : i32
    %c0_i32_0 = arith.constant 0 : i32
    return %c0_i32, %arg1 : i32, i32
  }
  func.func @transform_6(%arg0: i32, %arg1: i32, %arg2: i32) -> (i32, i32) {
    %c0_i32 = arith.constant 0 : i32
    %c0_i32_0 = arith.constant 0 : i32
    %c0_i32_1 = arith.constant 0 : i32
    return %c0_i32, %c0_i32_0 : i32, i32
  }
}

</mosaic_0001>

<llo_original>
// kernel: _mkmmd_forward.3
$region0: #{_mkmmd_forward.3}
  #allocation0 [shape = 'u32[]', space=smem, size = 0x4, offset = 0x4, fixed_abs, tag = 'smem constant byte address 0x4 - core index']
  #allocation1 [shape = 'u32[72,128]{1,0:T(1,128)}', space=vmem, size = 0x9000, scoped, tag = 'internal scratch']
  #allocation2 [shape = 'f32[8,8]{1,0:T(8,128)}', space=vmem, size = 0x1000, scoped, tag = 'scratch operand']
  %s0 = inlined_call_operand.vmem [shape: f32[5], index: 0, kind: input, shape index: {}]
  %s1 = inlined_call_operand.vmem [shape: f32[5], index: 1, kind: input, shape index: {}]
  %s2 = inlined_call_operand.vmem [shape: f32[8,128], index: 2, kind: input, shape index: {}, may-alias: {2,3}]
  %s3 = inlined_call_operand.vmem [shape: f32[8,128], index: 3, kind: input, shape index: {}, may-alias: {2,3}]
  %s4 = inlined_call_operand.vmem [shape: f32[8,1], index: 4, kind: input, shape index: {}]
  %s5 = inlined_call_operand.vmem [shape: f32[1,8], index: 5, kind: input, shape index: {}]
  %s6 = inlined_call_operand.hbm [shape: f32[1,1], index: 6, kind: output, shape index: {}]
  %s7 = sld [smem:[#allocation0]]
  $region54: #{_mkmmd_forward.3} parent=0
    _
  %s9 = ssub.s32 1, %s7
  %s10 = scalar_select 0, %s9, %s7
  $region1: #{_mkmmd_forward.3} parent=0
    #allocation3 [shape = 'u8[512]{0}', space=smem, size = 0x200, scoped, tag = 'input window, operand 0, single buffered']
    #allocation4 [shape = 's32[1]{0}', space=sflag, size = 0x4, scoped, tag = 'scoped memory for _mkmmd_forward.3']
    #allocation5 [shape = 's32[1]{0}', space=sflag, size = 0x4, scoped, tag = 'scoped memory for _mkmmd_forward.3']
    #allocation6 [shape = 'u8[512]{0}', space=smem, size = 0x200, scoped, tag = 'input window, operand 1, single buffered']
    #allocation7 [shape = 's32[1]{0}', space=sflag, size = 0x4, scoped, tag = 'scoped memory for _mkmmd_forward.3']
    #allocation8 [shape = 'u8[512]{0}', space=vmem, size = 0x400, scoped, tag = 'output window, operand 0, single buffered']
    %11 = vsyncpa [#allocation5], 0
    %12 = vsyncpa [#allocation7], 0
    %13 = vsyncpa [#allocation4], 0
    // Predicated region
    $region2: #{_mkmmd_forward.3} parent=1 // pred_check
      _
    $region3: #{_mkmmd_forward.3} parent=1 // pred_check_branch
      %15 = sbr.rel (0) target = $region5
    $region4: #{_mkmmd_forward.3} parent=1 // pred_region
      %17 = vsyncadd [#allocation5], 0
      %s19 = sshll.u32 %s0, 4
      %s20 = int_to_ptr.vmem [resolvable:$true] %s19
      %22 = dma.vmem_to_smem %s20, 16, [#allocation3], [#allocation5]
    $region5: #{_mkmmd_forward.3} parent=1 // pred_fallthru
      _
    // Predicated region
    $region6: #{_mkmmd_forward.3} parent=1 // pred_check
      _
    $region7: #{_mkmmd_forward.3} parent=1 // pred_check_branch
      %24 = sbr.rel (0) target = $region9
    $region8: #{_mkmmd_forward.3} parent=1 // pred_region
      %26 = vsyncadd [#allocation7], 0
      %s28 = sshll.u32 %s1, 4
      %s29 = int_to_ptr.vmem [resolvable:$true] %s28
      %31 = dma.vmem_to_smem %s29, 16, [#allocation6], [#allocation7]
    $region9: #{_mkmmd_forward.3} parent=1 // pred_fallthru
      _
    // Predicated region
    $region10: #{_mkmmd_forward.3} parent=1 // pred_check
      _
    $region11: #{_mkmmd_forward.3} parent=1 // pred_check_branch
      %33 = sbr.rel (0) target = $region13
    $region12: #{_mkmmd_forward.3} parent=1 // pred_region
      _
    $region13: #{_mkmmd_forward.3} parent=1 // pred_fallthru
      _
    // Predicated region
    $region14: #{_mkmmd_forward.3} parent=1 // pred_check
      _
    $region15: #{_mkmmd_forward.3} parent=1 // pred_check_branch
      %35 = sbr.rel (0) target = $region17
    $region16: #{_mkmmd_forward.3} parent=1 // pred_region
      _
    $region17: #{_mkmmd_forward.3} parent=1 // pred_fallthru
      _
    // Predicated region
    $region18: #{_mkmmd_forward.3} parent=1 // pred_check
      _
    $region19: #{_mkmmd_forward.3} parent=1 // pred_check_branch
      %37 = sbr.rel (0) target = $region21
    $region20: #{_mkmmd_forward.3} parent=1 // pred_region
      _
    $region21: #{_mkmmd_forward.3} parent=1 // pred_fallthru
      _
    // Predicated region
    $region22: #{_mkmmd_forward.3} parent=1 // pred_check
      _
    $region23: #{_mkmmd_forward.3} parent=1 // pred_check_branch
      %39 = sbr.rel (0) target = $region25
    $region24: #{_mkmmd_forward.3} parent=1 // pred_region
      _
    $region25: #{_mkmmd_forward.3} parent=1 // pred_fallthru
      _
    // Predicated region
    $region26: #{_mkmmd_forward.3} parent=1 // pred_check
      _
    $region27: #{_mkmmd_forward.3} parent=1 // pred_check_branch
      %41 = sbr.rel (0) target = $region29
    $region28: #{_mkmmd_forward.3} parent=1 // pred_region
      %43 = dma.done [#allocation5], 16
    $region29: #{_mkmmd_forward.3} parent=1 // pred_fallthru
      _
    // Predicated region
    $region30: #{_mkmmd_forward.3} parent=1 // pred_check
      _
    $region31: #{_mkmmd_forward.3} parent=1 // pred_check_branch
      %45 = sbr.rel (0) target = $region33
    $region32: #{_mkmmd_forward.3} parent=1 // pred_region
      %47 = dma.done [#allocation7], 16
    $region33: #{_mkmmd_forward.3} parent=1 // pred_fallthru
      _
    %48 = sfence
    %p49 = scmp.eq.s32.totalorder 0, 0
    %p50 = scmp.eq.s32.totalorder 0, 0
    %p51 = pnand %p49, %p50
    %p52 = pneg %p51
    %p53 = scmp.eq.s32.totalorder 0, 0
    %p54 = pnand %p52, %p53
    %p55 = pneg %p54
    // Predicated region
    $region34: #{_mkmmd_forward.3} parent=1 // pred_check
      _
    $region35: #{_mkmmd_forward.3} parent=1 // pred_check_branch
      %57 = sbr.rel (%p54) target = $region37
    $region36: #{_mkmmd_forward.3} parent=1 // pred_region
      %vm58 = vcmask 0
      %59 = vst.msk [vmem:[#allocation8] sm:$0x1] %vm58, 0.0
    $region37: #{_mkmmd_forward.3} parent=1 // pred_fallthru
      _
    // Predicated region
    $region38: #{_mkmmd_forward.3} parent=1 // pred_check
      %p60 = pneg %p53
    $region39: #{_mkmmd_forward.3} parent=1 // pred_check_branch
      %62 = sbr.rel (%p60) target = $region41
    $region40: #{_mkmmd_forward.3} parent=1 // pred_region
      %vm63 = vcmask 64512
      %64 = vst.msk [vmem:[#allocation2] sm:$0xff] %vm63, 0.0
    $region41: #{_mkmmd_forward.3} parent=1 // pred_fallthru
      _
    %v65 = vld [vmem:[#allocation2] sm:$0xff]
    %v66 = vld [vmem:[%s2] sm:$0xff]
    %v67 = vld [vmem:[%s3] sm:$0xff]
    %68 = vmatpush.xpose.msra.mxu0 0.0
    %69 = vmatpush.xpose.msra.mxu0 0.0
    %70 = vmatpush.xpose.msra.mxu0 0.0
    %71 = vmatpush.xpose.msra.mxu0 0.0
    %72 = vmatpush.xpose.msra.mxu0 0.0
    %73 = vmatpush.xpose.msra.mxu0 0.0
    %74 = vmatpush.xpose.msra.mxu0 0.0
    %75 = vmatpush.xpose.msra.mxu0 0.0
    %76 = vmatpush.xpose.msra.mxu0 0.0
    %77 = vmatpush.xpose.msra.mxu0 0.0
    %78 = vmatpush.xpose.msra.mxu0 0.0
    %79 = vmatpush.xpose.msra.mxu0 0.0
    %80 = vmatpush.xpose.msra.mxu0 0.0
    %81 = vmatpush.xpose.msra.mxu0 0.0
    %82 = vmatpush.xpose.msra.mxu0 0.0
    %83 = vmatpush.xpose.msra.mxu0 %v67
    %84 = vmatmul.f32.gmra.mxu0 %v66
    %v85 = vpop.f32.mrf.mxu0
    %v86 = vadd.f32 0.0, %v85
    %87 = vdwg.mxu0
    %v88 = vadd.f32 %v65, %v86
    %vm89 = vcmask 64512
    %90 = vst.msk [vmem:[#allocation2] sm:$0xff] %vm89, %v88
    // Predicated region
    $region42: #{_mkmmd_forward.3} parent=1 // pred_check
      %p91 = pneg %p53
    $region43: #{_mkmmd_forward.3} parent=1 // pred_check_branch
      %93 = sbr.rel (%p91) target = $region45
    $region44: #{_mkmmd_forward.3} parent=1 // pred_region
      %v94 = vld [vmem:[%s4] sm:$0xff]
      %v95 = vld [vmem:[%s5] sm:$0x1]
      %97 = vset.pattern.permute.xlu0 0
      %98 = vperm.xlu0 %97, %v94
      %v99 = vpop.permute.xlu0 %98
      %v102 = vperm.slane %v95, 0
      %v104 = vadd.f32 %v99, %v102
      %v105 = vld [vmem:[#allocation2] sm:$0xff]
      %v106 = vmul.f32 %v105, 2.0
      %v107 = vsub.f32 %v104, %v106
      %v108 = vmax.f32 %v107, 0.0
      %s109 = smul.u32 0, 8
      %v110 = vlaneseq
      %v111 = vshrl.u32 %v110, 7
      %v112 = vstv %s109
      %v113 = vadd.s32 %v112, %v111
      %s114 = smul.u32 0, 8
      %v115 = vlaneseq
      %v116 = vand.u32 %v115, 127
      %v117 = vstv %s114
      %v118 = vadd.s32 %v117, %v116
      %vm119 = vcmp.eq.s32.totalorder %v113, %v118
      %v120 = vsel %vm119, 0.0, %v108
      %s121 = sld [smem:[#allocation3 + $0x4]]
      %v122 = vstv %s121
      %v123 = vmul.f32 %v120, %v122
      %v124 = vmul.f32 %v123, 1.442695
      %v125 = vpow.pop %v124
      %s126 = sld [smem:[#allocation6 + $0x4]]
      %v127 = vstv %s126
      %v128 = vmul.f32 %v127, %v125
      %v129 = vmul.f32 %v125, %v125
      %s130 = sld [smem:[#allocation6 + $0x3]]
      %v131 = vstv %s130
      %v132 = vmul.f32 %v131, %v129
      %v133 = vadd.f32 %v128, %v132
      %v134 = vmul.f32 %v129, %v129
      %s135 = sld [smem:[#allocation6 + $0x2]]
      %v136 = vstv %s135
      %v137 = vmul.f32 %v136, %v134
      %v138 = vadd.f32 %v133, %v137
      %v139 = vmul.f32 %v134, %v134
      %s140 = sld [smem:[#allocation6 + $0x1]]
      %v141 = vstv %s140
      %v142 = vmul.f32 %v141, %v139
      %v143 = vadd.f32 %v138, %v142
      %v144 = vmul.f32 %v139, %v139
      %s145 = sld [smem:[#allocation6]]
      %v146 = vstv %s145
      %v147 = vmul.f32 %v146, %v144
      %v148 = vadd.f32 %v143, %v147
      %v149 = vld [vmem:[#allocation8] sm:$0x1]
      %v150 = vsel %vm89, %v148, 0.0
      %151 = vadd.xlane.f32.xlu0 %v150
      %v152 = vpop.xlane.xlu0 %151
      %v153 = vrot.slane %v152, 4
      %v154 = vadd.f32 %v152, %v153
      %v155 = vrot.slane %v154, 2
      %v156 = vadd.f32 %v154, %v155
      %v157 = vrot.slane %v156, 1
      %v158 = vadd.f32 %v156, %v157
      %s159 = vtos %v158
      %v160 = vstv %s159
      %v161 = vadd.f32 %v149, %v160
      %vm162 = vcmask 0
      %163 = vst.msk [vmem:[#allocation8] sm:$0x1] %vm162, %v161
    $region45: #{_mkmmd_forward.3} parent=1 // pred_fallthru
      _
    // Predicated region
    $region46: #{_mkmmd_forward.3} parent=1 // pred_check
      _
    $region47: #{_mkmmd_forward.3} parent=1 // pred_check_branch
      %165 = sbr.rel (0) target = $region49
    $region48: #{_mkmmd_forward.3} parent=1 // pred_region
      %167 = vsyncadd [#allocation4], 0
      %s169 = sshll.u32 [#allocation8], 4
      %s170 = int_to_ptr.vmem [resolvable:$true] %s169
      %s171 = sshll.u32 %s6, 4
      %s172 = int_to_ptr.hbm [resolvable:$true] %s171
      %174 = dma.vmem_to_hbm [thread:$0]  %s170, 16, %s172, [#allocation4]
    $region49: #{_mkmmd_forward.3} parent=1 // pred_fallthru
      _
    // Predicated region
    $region50: #{_mkmmd_forward.3} parent=1 // pred_check
      _
    $region51: #{_mkmmd_forward.3} parent=1 // pred_check_branch
      %176 = sbr.rel (0) target = $region53
    $region52: #{_mkmmd_forward.3} parent=1 // pred_region
      %178 = dma.done [#allocation4], 16
    $region53: #{_mkmmd_forward.3} parent=1 // pred_fallthru
      _
    %179 = vsyncpa [#allocation4], 1
    %180 = vsyncpa [#allocation5], 1
    %181 = vsyncpa [#allocation7], 1

// kernel: _mkmmd_forward.5
$region0: #{_mkmmd_forward.5}
  #allocation0 [shape = 'u32[]', space=smem, size = 0x4, offset = 0x4, fixed_abs, tag = 'smem constant byte address 0x4 - core index']
  #allocation1 [shape = 'u32[72,128]{1,0:T(1,128)}', space=vmem, size = 0x9000, scoped, tag = 'internal scratch']
  #allocation2 [shape = 'f32[8,8]{1,0:T(8,128)}', space=vmem, size = 0x1000, scoped, tag = 'scratch operand']
  %s0 = inlined_call_operand.vmem [shape: f32[5], index: 0, kind: input, shape index: {}]
  %s1 = inlined_call_operand.vmem [shape: f32[5], index: 1, kind: input, shape index: {}]
  %s2 = inlined_call_operand.vmem [shape: f32[8,128], index: 2, kind: input, shape index: {}]
  %s3 = inlined_call_operand.vmem [shape: f32[8,128], index: 3, kind: input, shape index: {}]
  %s4 = inlined_call_operand.vmem [shape: f32[8,1], index: 4, kind: input, shape index: {}]
  %s5 = inlined_call_operand.vmem [shape: f32[1,8], index: 5, kind: input, shape index: {}]
  %s6 = inlined_call_operand.hbm [shape: f32[1,1], index: 6, kind: output, shape index: {}]
  %s7 = sld [smem:[#allocation0]]
  $region54: #{_mkmmd_forward.5} parent=0
    _
  %s9 = ssub.s32 1, %s7
  %s10 = scalar_select 0, %s9, %s7
  $region1: #{_mkmmd_forward.5} parent=0
    #allocation3 [shape = 'u8[512]{0}', space=smem, size = 0x200, scoped, tag = 'input window, operand 0, single buffered']
    #allocation4 [shape = 's32[1]{0}', space=sflag, size = 0x4, scoped, tag = 'scoped memory for _mkmmd_forward.5']
    #allocation5 [shape = 's32[1]{0}', space=sflag, size = 0x4, scoped, tag = 'scoped memory for _mkmmd_forward.5']
    #allocation6 [shape = 'u8[512]{0}', space=smem, size = 0x200, scoped, tag = 'input window, operand 1, single buffered']
    #allocation7 [shape = 's32[1]{0}', space=sflag, size = 0x4, scoped, tag = 'scoped memory for _mkmmd_forward.5']
    #allocation8 [shape = 'u8[512]{0}', space=vmem, size = 0x400, scoped, tag = 'output window, operand 0, single buffered']
    %11 = vsyncpa [#allocation5], 0
    %12 = vsyncpa [#allocation7], 0
    %13 = vsyncpa [#allocation4], 0
    // Predicated region
    $region2: #{_mkmmd_forward.5} parent=1 // pred_check
      _
    $region3: #{_mkmmd_forward.5} parent=1 // pred_check_branch
      %15 = sbr.rel (0) target = $region5
    $region4: #{_mkmmd_forward.5} parent=1 // pred_region
      %17 = vsyncadd [#allocation5], 0
      %s19 = sshll.u32 %s0, 4
      %s20 = int_to_ptr.vmem [resolvable:$true] %s19
      %22 = dma.vmem_to_smem %s20, 16, [#allocation3], [#allocation5]
    $region5: #{_mkmmd_forward.5} parent=1 // pred_fallthru
      _
    // Predicated region
    $region6: #{_mkmmd_forward.5} parent=1 // pred_check
      _
    $region7: #{_mkmmd_forward.5} parent=1 // pred_check_branch
      %24 = sbr.rel (0) target = $region9
    $region8: #{_mkmmd_forward.5} parent=1 // pred_region
      %26 = vsyncadd [#allocation7], 0
      %s28 = sshll.u32 %s1, 4
      %s29 = int_to_ptr.vmem [resolvable:$true] %s28
      %31 = dma.vmem_to_smem %s29, 16, [#allocation6], [#allocation7]
    $region9: #{_mkmmd_forward.5} parent=1 // pred_fallthru
      _
    // Predicated region
    $region10: #{_mkmmd_forward.5} parent=1 // pred_check
      _
    $region11: #{_mkmmd_forward.5} parent=1 // pred_check_branch
      %33 = sbr.rel (0) target = $region13
    $region12: #{_mkmmd_forward.5} parent=1 // pred_region
      _
    $region13: #{_mkmmd_forward.5} parent=1 // pred_fallthru
      _
    // Predicated region
    $region14: #{_mkmmd_forward.5} parent=1 // pred_check
      _
    $region15: #{_mkmmd_forward.5} parent=1 // pred_check_branch
      %35 = sbr.rel (0) target = $region17
    $region16: #{_mkmmd_forward.5} parent=1 // pred_region
      _
    $region17: #{_mkmmd_forward.5} parent=1 // pred_fallthru
      _
    // Predicated region
    $region18: #{_mkmmd_forward.5} parent=1 // pred_check
      _
    $region19: #{_mkmmd_forward.5} parent=1 // pred_check_branch
      %37 = sbr.rel (0) target = $region21
    $region20: #{_mkmmd_forward.5} parent=1 // pred_region
      _
    $region21: #{_mkmmd_forward.5} parent=1 // pred_fallthru
      _
    // Predicated region
    $region22: #{_mkmmd_forward.5} parent=1 // pred_check
      _
    $region23: #{_mkmmd_forward.5} parent=1 // pred_check_branch
      %39 = sbr.rel (0) target = $region25
    $region24: #{_mkmmd_forward.5} parent=1 // pred_region
      _
    $region25: #{_mkmmd_forward.5} parent=1 // pred_fallthru
      _
    // Predicated region
    $region26: #{_mkmmd_forward.5} parent=1 // pred_check
      _
    $region27: #{_mkmmd_forward.5} parent=1 // pred_check_branch
      %41 = sbr.rel (0) target = $region29
    $region28: #{_mkmmd_forward.5} parent=1 // pred_region
      %43 = dma.done [#allocation5], 16
    $region29: #{_mkmmd_forward.5} parent=1 // pred_fallthru
      _
    // Predicated region
    $region30: #{_mkmmd_forward.5} parent=1 // pred_check
      _
    $region31: #{_mkmmd_forward.5} parent=1 // pred_check_branch
      %45 = sbr.rel (0) target = $region33
    $region32: #{_mkmmd_forward.5} parent=1 // pred_region
      %47 = dma.done [#allocation7], 16
    $region33: #{_mkmmd_forward.5} parent=1 // pred_fallthru
      _
    %48 = sfence
    %p49 = scmp.eq.s32.totalorder 0, 0
    %p50 = scmp.eq.s32.totalorder 0, 0
    %p51 = pnand %p49, %p50
    %p52 = pneg %p51
    %p53 = scmp.eq.s32.totalorder 0, 0
    %p54 = pnand %p52, %p53
    %p55 = pneg %p54
    // Predicated region
    $region34: #{_mkmmd_forward.5} parent=1 // pred_check
      _
    $region35: #{_mkmmd_forward.5} parent=1 // pred_check_branch
      %57 = sbr.rel (%p54) target = $region37
    $region36: #{_mkmmd_forward.5} parent=1 // pred_region
      %vm58 = vcmask 0
      %59 = vst.msk [vmem:[#allocation8] sm:$0x1] %vm58, 0.0
    $region37: #{_mkmmd_forward.5} parent=1 // pred_fallthru
      _
    // Predicated region
    $region38: #{_mkmmd_forward.5} parent=1 // pred_check
      %p60 = pneg %p53
    $region39: #{_mkmmd_forward.5} parent=1 // pred_check_branch
      %62 = sbr.rel (%p60) target = $region41
    $region40: #{_mkmmd_forward.5} parent=1 // pred_region
      %vm63 = vcmask 64512
      %64 = vst.msk [vmem:[#allocation2] sm:$0xff] %vm63, 0.0
    $region41: #{_mkmmd_forward.5} parent=1 // pred_fallthru
      _
    %v65 = vld [vmem:[#allocation2] sm:$0xff]
    %v66 = vld [vmem:[%s2] sm:$0xff]
    %v67 = vld [vmem:[%s3] sm:$0xff]
    %68 = vmatpush.xpose.msra.mxu0 0.0
    %69 = vmatpush.xpose.msra.mxu0 0.0
    %70 = vmatpush.xpose.msra.mxu0 0.0
    %71 = vmatpush.xpose.msra.mxu0 0.0
    %72 = vmatpush.xpose.msra.mxu0 0.0
    %73 = vmatpush.xpose.msra.mxu0 0.0
    %74 = vmatpush.xpose.msra.mxu0 0.0
    %75 = vmatpush.xpose.msra.mxu0 0.0
    %76 = vmatpush.xpose.msra.mxu0 0.0
    %77 = vmatpush.xpose.msra.mxu0 0.0
    %78 = vmatpush.xpose.msra.mxu0 0.0
    %79 = vmatpush.xpose.msra.mxu0 0.0
    %80 = vmatpush.xpose.msra.mxu0 0.0
    %81 = vmatpush.xpose.msra.mxu0 0.0
    %82 = vmatpush.xpose.msra.mxu0 0.0
    %83 = vmatpush.xpose.msra.mxu0 %v67
    %84 = vmatmul.f32.gmra.mxu0 %v66
    %v85 = vpop.f32.mrf.mxu0
    %v86 = vadd.f32 0.0, %v85
    %87 = vdwg.mxu0
    %v88 = vadd.f32 %v65, %v86
    %vm89 = vcmask 64512
    %90 = vst.msk [vmem:[#allocation2] sm:$0xff] %vm89, %v88
    // Predicated region
    $region42: #{_mkmmd_forward.5} parent=1 // pred_check
      %p91 = pneg %p53
    $region43: #{_mkmmd_forward.5} parent=1 // pred_check_branch
      %93 = sbr.rel (%p91) target = $region45
    $region44: #{_mkmmd_forward.5} parent=1 // pred_region
      %v94 = vld [vmem:[%s4] sm:$0xff]
      %v95 = vld [vmem:[%s5] sm:$0x1]
      %97 = vset.pattern.permute.xlu0 0
      %98 = vperm.xlu0 %97, %v94
      %v99 = vpop.permute.xlu0 %98
      %v102 = vperm.slane %v95, 0
      %v104 = vadd.f32 %v99, %v102
      %v105 = vld [vmem:[#allocation2] sm:$0xff]
      %v106 = vmul.f32 %v105, 2.0
      %v107 = vsub.f32 %v104, %v106
      %v108 = vmax.f32 %v107, 0.0
      %s109 = sld [smem:[#allocation3 + $0x4]]
      %v110 = vstv %s109
      %v111 = vmul.f32 %v108, %v110
      %v112 = vmul.f32 %v111, 1.442695
      %v113 = vpow.pop %v112
      %s114 = sld [smem:[#allocation6 + $0x4]]
      %v115 = vstv %s114
      %v116 = vmul.f32 %v115, %v113
      %v117 = vmul.f32 %v113, %v113
      %s118 = sld [smem:[#allocation6 + $0x3]]
      %v119 = vstv %s118
      %v120 = vmul.f32 %v119, %v117
      %v121 = vadd.f32 %v116, %v120
      %v122 = vmul.f32 %v117, %v117
      %s123 = sld [smem:[#allocation6 + $0x2]]
      %v124 = vstv %s123
      %v125 = vmul.f32 %v124, %v122
      %v126 = vadd.f32 %v121, %v125
      %v127 = vmul.f32 %v122, %v122
      %s128 = sld [smem:[#allocation6 + $0x1]]
      %v129 = vstv %s128
      %v130 = vmul.f32 %v129, %v127
      %v131 = vadd.f32 %v126, %v130
      %v132 = vmul.f32 %v127, %v127
      %s133 = sld [smem:[#allocation6]]
      %v134 = vstv %s133
      %v135 = vmul.f32 %v134, %v132
      %v136 = vadd.f32 %v131, %v135
      %v137 = vld [vmem:[#allocation8] sm:$0x1]
      %v138 = vsel %vm89, %v136, 0.0
      %139 = vadd.xlane.f32.xlu0 %v138
      %v140 = vpop.xlane.xlu0 %139
      %v141 = vrot.slane %v140, 4
      %v142 = vadd.f32 %v140, %v141
      %v143 = vrot.slane %v142, 2
      %v144 = vadd.f32 %v142, %v143
      %v145 = vrot.slane %v144, 1
      %v146 = vadd.f32 %v144, %v145
      %s147 = vtos %v146
      %v148 = vstv %s147
      %v149 = vadd.f32 %v137, %v148
      %vm150 = vcmask 0
      %151 = vst.msk [vmem:[#allocation8] sm:$0x1] %vm150, %v149
    $region45: #{_mkmmd_forward.5} parent=1 // pred_fallthru
      _
    // Predicated region
    $region46: #{_mkmmd_forward.5} parent=1 // pred_check
      _
    $region47: #{_mkmmd_forward.5} parent=1 // pred_check_branch
      %153 = sbr.rel (0) target = $region49
    $region48: #{_mkmmd_forward.5} parent=1 // pred_region
      %155 = vsyncadd [#allocation4], 0
      %s157 = sshll.u32 [#allocation8], 4
      %s158 = int_to_ptr.vmem [resolvable:$true] %s157
      %s159 = sshll.u32 %s6, 4
      %s160 = int_to_ptr.hbm [resolvable:$true] %s159
      %162 = dma.vmem_to_hbm [thread:$0]  %s158, 16, %s160, [#allocation4]
    $region49: #{_mkmmd_forward.5} parent=1 // pred_fallthru
      _
    // Predicated region
    $region50: #{_mkmmd_forward.5} parent=1 // pred_check
      _
    $region51: #{_mkmmd_forward.5} parent=1 // pred_check_branch
      %164 = sbr.rel (0) target = $region53
    $region52: #{_mkmmd_forward.5} parent=1 // pred_region
      %166 = dma.done [#allocation4], 16
    $region53: #{_mkmmd_forward.5} parent=1 // pred_fallthru
      _
    %167 = vsyncpa [#allocation4], 1
    %168 = vsyncpa [#allocation5], 1
    %169 = vsyncpa [#allocation7], 1

</llo_original>
